<compile_context>
chip_gen: v7x
topology: tpu7x:2x2x1
jax: 0.10.0
libtpu: 0.0.40
codegen_flags: <defaults>
</compile_context>

<pallas_src>
import functools

import jax
import jax.numpy as jnp
from jax.experimental import pallas as pl
from jax.experimental.pallas import tpu as pltpu

NHID = 32      # params['nhid']
B = 1          # hebb update only valid for batch == 1
LN_EPS = 1e-5  # torch.nn.LayerNorm default eps

# Packed parameter slab row offsets (rows of a (SLAB_ROWS, NHID) f32 matrix).
ROW_W0 = 0        # 3 rows : w0 (3, nhid)
ROW_B0 = 8        # 1 row  : b0
ROW_LNG = 9       # 1 row  : LayerNorm gamma
ROW_LNB = 10      # 1 row  : LayerNorm beta
ROW_PEB = 11      # 1 row  : pred_eta_b
ROW_W1 = 12       # 1 row  : w1[:, 0] stored as a row
ROW_W = 16        # 32 rows: w
ROW_ALPHA = 48    # 32 rows: alpha
ROW_PE = 80       # 32 rows: pred_eta
SLAB_ROWS = 112

# TODO(synk): params['type'] == 'nonplastic' branch (hebb = 0) not modeled;
#             this implements the plastic path only.


def network_seq_kernel(x_ref, sc_ref, yin_ref, hebb0_ref, slab_ref,
                       yout_all_ref, out_all_ref, hebb_out_ref,
                       hebb_sc, y_sc):
    t = pl.program_id(0)

    @pl.when(t == 0)
    def _init():
        hebb_sc[...] = hebb0_ref[...]
        y_sc[...] = yin_ref[...]

    hebb = hebb_sc[...]          # (NHID, NHID) carried plastic state
    yin = y_sc[...]              # (1, NHID)    carried hidden state

    # i_t = relu(x_t @ w0) with K=3 -> three scalar-broadcast FMAs on the VPU
    # (skip the MXU round trip for this degenerate matmul). x_t is in SMEM.
    x0 = x_ref[t, 0]
    x1 = x_ref[t, 1]
    x2 = x_ref[t, 2]
    i_t = jnp.maximum(
        x0 * slab_ref[ROW_W0:ROW_W0 + 1, :]
        + x1 * slab_ref[ROW_W0 + 1:ROW_W0 + 2, :]
        + x2 * slab_ref[ROW_W0 + 2:ROW_W0 + 3, :],
        0.0)

    # ymid = yin @ (w + alpha * hebb)                (1,32)@(32,32) -> MXU
    w_eff = (slab_ref[ROW_W:ROW_W + NHID, :]
             + slab_ref[ROW_ALPHA:ROW_ALPHA + NHID, :] * hebb)
    ymid = jnp.dot(yin, w_eff, preferred_element_type=jnp.float32)

    # yout = relu(LayerNorm(ymid + i_t + b0))
    pre = ymid + i_t + slab_ref[ROW_B0:ROW_B0 + 1, :]
    mean = jnp.mean(pre, axis=-1, keepdims=True)
    var = jnp.mean(jnp.square(pre - mean), axis=-1, keepdims=True)
    ln = ((pre - mean) * jax.lax.rsqrt(var + LN_EPS)
          * slab_ref[ROW_LNG:ROW_LNG + 1, :]
          + slab_ref[ROW_LNB:ROW_LNB + 1, :])
    yout = jnp.maximum(ln, 0.0)

    # eta_hat = sigmoid(ymid @ pred_eta + pred_eta_b)  (1,32)@(32,32) -> MXU
    eta_hat = jax.nn.sigmoid(
        jnp.dot(ymid, slab_ref[ROW_PE:ROW_PE + NHID, :],
                preferred_element_type=jnp.float32)
        + slab_ref[ROW_PEB:ROW_PEB + 1, :])

    # hebb = (1 - eta) * hebb + eta_hat^T * outer(yin[0], ymid[0])
    # Fold eta_hat into yin row-wise so the rank-1 update is a single
    # dot_general contracting the batch dim (no transposes). Valid for B==1.
    scaled_yin = yin * eta_hat
    rank1 = jax.lax.dot_general(
        scaled_yin, ymid, (((0,), (0,)), ((), ())),
        preferred_element_type=jnp.float32)
    hebb_new = sc_ref[0] * hebb + rank1          # sc_ref[0] = 1 - eta (host-folded)

    # out = yout @ w1 + b1 with N=1 -> VPU multiply + lane reduce (skip MXU).
    out_val = jnp.sum(yout * slab_ref[ROW_W1:ROW_W1 + 1, :],
                      axis=-1, keepdims=True) + sc_ref[1]      # (1, 1)

    # Carry state + per-step outputs. Output blocks have a constant index map
    # so they stay resident in VMEM and write back to HBM once, at grid end.
    hebb_sc[...] = hebb_new
    y_sc[...] = yout
    yout_all_ref[pl.ds(t, 1), :] = yout
    out_all_ref[pl.ds(t, 1), :] = out_val

    @pl.when(t == pl.num_programs(0) - 1)
    def _finalize():
        hebb_out_ref[...] = hebb_new


def pack_params(params):
    (w0, b0, w, alpha, w1, b1, eta, pred_eta, pred_eta_b, ln_g, ln_b) = params
    slab = jnp.zeros((SLAB_ROWS, NHID), jnp.float32)
    slab = slab.at[ROW_W0:ROW_W0 + 3].set(w0)
    slab = slab.at[ROW_B0].set(b0.reshape(NHID))
    slab = slab.at[ROW_LNG].set(ln_g.reshape(NHID))
    slab = slab.at[ROW_LNB].set(ln_b.reshape(NHID))
    slab = slab.at[ROW_PEB].set(pred_eta_b.reshape(NHID))
    slab = slab.at[ROW_W1].set(w1.reshape(NHID))
    slab = slab.at[ROW_W:ROW_W + NHID].set(w)
    slab = slab.at[ROW_ALPHA:ROW_ALPHA + NHID].set(alpha)
    slab = slab.at[ROW_PE:ROW_PE + NHID].set(pred_eta)
    scalars = jnp.stack([1.0 - eta.reshape(()),
                         b1.reshape(())]).astype(jnp.float32)
    return slab, scalars


@jax.jit
def network_forward_seq(x_seq, yin, hebb, params):
    """Run T fused recurrent steps.  Returns (yout[T,NHID], out[T,1], hebb)."""
    assert yin.shape[0] == 1, "hebb update is only defined for batch == 1"
    T = x_seq.shape[0]
    slab, scalars = pack_params(params)

    smem = pl.BlockSpec(memory_space=pltpu.MemorySpace.SMEM)

    def resident(shape):
        return pl.BlockSpec(shape, lambda t: (0, 0))

    out_shape = (
        jax.ShapeDtypeStruct((T, NHID), jnp.float32),      # yout per step
        jax.ShapeDtypeStruct((T, 1), jnp.float32),         # out per step
        jax.ShapeDtypeStruct((NHID, NHID), jnp.float32),   # final hebb
    )
    return pl.pallas_call(
        network_seq_kernel,
        out_shape=out_shape,
        grid=(T,),
        in_specs=[
            smem,                                  # x_seq      -> SMEM scalars
            smem,                                  # [1-eta,b1] -> SMEM scalars
            resident((1, NHID)),                   # yin   (loaded once)
            resident((NHID, NHID)),                # hebb0 (loaded once)
            resident((SLAB_ROWS, NHID)),           # packed params (loaded once)
        ],
        out_specs=(
            resident((T, NHID)),
            resident((T, 1)),
            resident((NHID, NHID)),
        ),
        scratch_shapes=[
            pltpu.VMEM((NHID, NHID), jnp.float32),   # hebb carried state
            pltpu.VMEM((1, NHID), jnp.float32),      # y    carried state
        ],
        compiler_params=pltpu.CompilerParams(
            dimension_semantics=("arbitrary",)),
    )(x_seq, scalars, yin, hebb, slab)


def make_params(key):
    ks = jax.random.split(key, 7)
    w0 = 0.01 * jax.random.normal(ks[0], (3, NHID), jnp.float32)
    b0 = 0.01 * jax.random.normal(ks[1], (1, NHID), jnp.float32)
    w = 0.01 * jnp.eye(NHID, dtype=jnp.float32)
    alpha = 0.01 * jax.random.normal(ks[2], (NHID, NHID), jnp.float32)
    w1 = 0.01 * jax.random.normal(ks[3], (NHID, 1), jnp.float32)
    b1 = 0.01 * jax.random.normal(ks[4], (1, 1), jnp.float32)
    eta = 0.01 * jnp.ones((1, 1), jnp.float32)
    pred_eta = 0.01 * jax.random.normal(ks[5], (NHID, NHID), jnp.float32)
    pred_eta_b = 0.01 * jax.random.normal(ks[6], (1, NHID), jnp.float32)
    ln_g = jnp.ones((1, NHID), jnp.float32)    # LayerNorm default weight
    ln_b = jnp.zeros((1, NHID), jnp.float32)   # LayerNorm default bias
    return (w0, b0, w, alpha, w1, b1, eta, pred_eta, pred_eta_b, ln_g, ln_b)


def reference_step(x, yin, hebb, params):
    (w0, b0, w, alpha, w1, b1, eta, pred_eta, pred_eta_b, ln_g, ln_b) = params
    i_t = jax.nn.relu(x @ w0)
    ymid = yin @ (w + alpha * hebb)
    pre = ymid + i_t + b0
    mean = jnp.mean(pre, axis=-1, keepdims=True)
    var = jnp.mean(jnp.square(pre - mean), axis=-1, keepdims=True)
    yout = jax.nn.relu((pre - mean) / jnp.sqrt(var + LN_EPS) * ln_g + ln_b)
    eta_hat = jax.nn.sigmoid(ymid @ pred_eta + pred_eta_b)
    outer = yin[0][:, None] * ymid[0][None, :]
    hebb_new = (1.0 - eta) * hebb + eta_hat.T * outer
    out = yout @ w1 + b1
    return yout, hebb_new, out


if __name__ == "__main__":
    T = 8
    key = jax.random.PRNGKey(0)
    k_par, k_x, k_y = jax.random.split(key, 3)
    params = make_params(k_par)

    x_seq = jax.random.normal(k_x, (T, 3), jnp.float32)
    yin0 = 0.1 * jax.random.normal(k_y, (B, NHID), jnp.float32)
    hebb0 = jnp.zeros((NHID, NHID), jnp.float32) + 1e-6   # initialZeroHebb()

    yout_all, out_all, hebb_final = jax.block_until_ready(
        network_forward_seq(x_seq, yin0, hebb0, params))

    # Reference: unrolled per-step loop of the original module's forward.
    y, h = yin0, hebb0
    r_youts, r_outs = [], []
    for t in range(T):
        y, h, o = reference_step(x_seq[t:t + 1], y, h, params)
        r_youts.append(y)
        r_outs.append(o)
    r_yout_all = jnp.concatenate(r_youts, axis=0)
    r_out_all = jnp.concatenate(r_outs, axis=0)

    assert jnp.allclose(yout_all, r_yout_all, atol=1e-5), \
        float(jnp.max(jnp.abs(yout_all - r_yout_all)))
    assert jnp.allclose(out_all, r_out_all, atol=1e-5), \
        float(jnp.max(jnp.abs(out_all - r_out_all)))
    assert jnp.allclose(hebb_final, h, atol=1e-5), \
        float(jnp.max(jnp.abs(hebb_final - h)))

    print("KERNEL_OK")
</pallas_src>

<mosaic_0001>
module attributes {stable_mosaic.version = 11 : i64} {
  func.func @network_seq_kernel(%arg0: i32, %arg1: memref<8x3xf32, #tpu.memory_space<smem>>, %arg2: memref<2xf32, #tpu.memory_space<smem>>, %arg3: memref<1x32xf32, #tpu.memory_space<vmem>>, %arg4: memref<32x32xf32, #tpu.memory_space<vmem>>, %arg5: memref<112x32xf32, #tpu.memory_space<vmem>>, %arg6: memref<8x32xf32, #tpu.memory_space<vmem>>, %arg7: memref<8x1xf32, #tpu.memory_space<vmem>>, %arg8: memref<32x32xf32, #tpu.memory_space<vmem>>, %arg9: memref<32x32xf32, #tpu.memory_space<vmem>>, %arg10: memref<1x32xf32, #tpu.memory_space<vmem>>) attributes {dimension_semantics = [#tpu.dimension_semantics<arbitrary>], iteration_bounds = array<i64: 8>, scalar_prefetch = 0 : i64, scratch_operands = 2 : i64, tpu.core_type = #tpu.core_type<tc>, window_params = [{transform_indices = @transform_0, window_bounds = array<i64: 8, 3>}, {transform_indices = @transform_1, window_bounds = array<i64: 2>}, {pipeline_mode = #tpu.pipeline_mode<synchronous>, transform_indices = @transform_2, window_bounds = array<i64: 1, 32>}, {pipeline_mode = #tpu.pipeline_mode<synchronous>, transform_indices = @transform_3, window_bounds = array<i64: 32, 32>}, {pipeline_mode = #tpu.pipeline_mode<synchronous>, transform_indices = @transform_4, window_bounds = array<i64: 112, 32>}, {pipeline_mode = #tpu.pipeline_mode<synchronous>, transform_indices = @transform_5, window_bounds = array<i64: 8, 32>}, {pipeline_mode = #tpu.pipeline_mode<synchronous>, transform_indices = @transform_6, window_bounds = array<i64: 8, 1>}, {pipeline_mode = #tpu.pipeline_mode<synchronous>, transform_indices = @transform_7, window_bounds = array<i64: 32, 32>}]} {
    %c0_i32 = arith.constant 0 : i32
    %0 = arith.cmpi eq, %arg0, %c0_i32 : i32
    %1 = arith.extui %0 : i1 to i32
    %c0_i32_0 = arith.constant 0 : i32
    %2 = arith.cmpi ne, %1, %c0_i32_0 : i32
    scf.if %2 {
      %c0_39 = arith.constant 0 : index
      %c0_40 = arith.constant 0 : index
      %87 = vector.load %arg4[%c0_39, %c0_40] : memref<32x32xf32, #tpu.memory_space<vmem>>, vector<32x32xf32>
      %c0_41 = arith.constant 0 : index
      %c0_42 = arith.constant 0 : index
      %88 = vector.load %arg9[%c0_41, %c0_42] : memref<32x32xf32, #tpu.memory_space<vmem>>, vector<32x32xf32>
      tpu.vector_store %arg9[%c0_41, %c0_42], %87 {strides = array<i32>} : memref<32x32xf32, #tpu.memory_space<vmem>>, vector<32x32xf32>,
      %c0_43 = arith.constant 0 : index
      %c0_44 = arith.constant 0 : index
      %89 = vector.load %arg3[%c0_43, %c0_44] : memref<1x32xf32, #tpu.memory_space<vmem>>, vector<1x32xf32>
      %c0_45 = arith.constant 0 : index
      %c0_46 = arith.constant 0 : index
      %90 = vector.load %arg10[%c0_45, %c0_46] : memref<1x32xf32, #tpu.memory_space<vmem>>, vector<1x32xf32>
      tpu.vector_store %arg10[%c0_45, %c0_46], %89 {strides = array<i32>} : memref<1x32xf32, #tpu.memory_space<vmem>>, vector<1x32xf32>,
    } else {
    }
    %c0 = arith.constant 0 : index
    %c0_1 = arith.constant 0 : index
    %3 = vector.load %arg9[%c0, %c0_1] : memref<32x32xf32, #tpu.memory_space<vmem>>, vector<32x32xf32>
    %c0_2 = arith.constant 0 : index
    %c0_3 = arith.constant 0 : index
    %4 = vector.load %arg10[%c0_2, %c0_3] : memref<1x32xf32, #tpu.memory_space<vmem>>, vector<1x32xf32>
    %5 = arith.index_cast %arg0 : i32 to index
    %c0_4 = arith.constant 0 : index
    %6 = memref.load %arg1[%5, %c0_4] : memref<8x3xf32, #tpu.memory_space<smem>>
    %7 = arith.index_cast %arg0 : i32 to index
    %c1 = arith.constant 1 : index
    %8 = memref.load %arg1[%7, %c1] : memref<8x3xf32, #tpu.memory_space<smem>>
    %9 = arith.index_cast %arg0 : i32 to index
    %c2 = arith.constant 2 : index
    %10 = memref.load %arg1[%9, %c2] : memref<8x3xf32, #tpu.memory_space<smem>>
    %c0_5 = arith.constant 0 : index
    %c0_6 = arith.constant 0 : index
    %11 = vector.load %arg5[%c0_5, %c0_6] : memref<112x32xf32, #tpu.memory_space<vmem>>, vector<1x32xf32>
    %12 = vector.broadcast %6 : f32 to vector<1x32xf32>
    %13 = arith.mulf %12, %11 : vector<1x32xf32>
    %c1_7 = arith.constant 1 : index
    %c0_8 = arith.constant 0 : index
    %14 = vector.load %arg5[%c1_7, %c0_8] : memref<112x32xf32, #tpu.memory_space<vmem>>, vector<1x32xf32>
    %15 = vector.broadcast %8 : f32 to vector<1x32xf32>
    %16 = arith.mulf %15, %14 : vector<1x32xf32>
    %17 = arith.addf %13, %16 : vector<1x32xf32>
    %c2_9 = arith.constant 2 : index
    %c0_10 = arith.constant 0 : index
    %18 = vector.load %arg5[%c2_9, %c0_10] : memref<112x32xf32, #tpu.memory_space<vmem>>, vector<1x32xf32>
    %19 = vector.broadcast %10 : f32 to vector<1x32xf32>
    %20 = arith.mulf %19, %18 : vector<1x32xf32>
    %21 = arith.addf %17, %20 : vector<1x32xf32>
    %cst = arith.constant 0.000000e+00 : f32
    %22 = vector.broadcast %cst : f32 to vector<1x32xf32>
    %23 = arith.maximumf %21, %22 : vector<1x32xf32>
    %c16 = arith.constant 16 : index
    %c0_11 = arith.constant 0 : index
    %24 = vector.load %arg5[%c16, %c0_11] : memref<112x32xf32, #tpu.memory_space<vmem>>, vector<32x32xf32>
    %c48 = arith.constant 48 : index
    %c0_12 = arith.constant 0 : index
    %25 = vector.load %arg5[%c48, %c0_12] : memref<112x32xf32, #tpu.memory_space<vmem>>, vector<32x32xf32>
    %26 = arith.mulf %25, %3 : vector<32x32xf32>
    %27 = arith.addf %24, %26 : vector<32x32xf32>
    %cst_13 = arith.constant dense<0.000000e+00> : vector<1x32xf32>
    %28 = tpu.matmul %4, %27, %cst_13 {dimension_numbers = #tpu.dot_dimension_numbers<[1], [0], [0], [1], [0, 0, 1, 1], [], []>} : vector<1x32xf32>, vector<32x32xf32>, vector<1x32xf32> -> vector<1x32xf32>
    %29 = arith.addf %28, %23 : vector<1x32xf32>
    %c8 = arith.constant 8 : index
    %c0_14 = arith.constant 0 : index
    %30 = vector.load %arg5[%c8, %c0_14] : memref<112x32xf32, #tpu.memory_space<vmem>>, vector<1x32xf32>
    %31 = arith.addf %29, %30 : vector<1x32xf32>
    %cst_15 = arith.constant dense<0.000000e+00> : vector<1xf32>
    %32 = vector.multi_reduction <add>, %31, %cst_15 [1] : vector<1x32xf32> to vector<1xf32>
    %33 = vector.shape_cast %32 : vector<1xf32> to vector<1x1xf32>
    %cst_16 = arith.constant 3.200000e+01 : f32
    %34 = vector.broadcast %cst_16 : f32 to vector<1x1xf32>
    %35 = arith.divf %33, %34 : vector<1x1xf32>
    %36 = vector.broadcast %35 : vector<1x1xf32> to vector<1x32xf32>
    %37 = arith.subf %31, %36 : vector<1x32xf32>
    %38 = arith.mulf %37, %37 : vector<1x32xf32>
    %cst_17 = arith.constant dense<0.000000e+00> : vector<1xf32>
    %39 = vector.multi_reduction <add>, %38, %cst_17 [1] : vector<1x32xf32> to vector<1xf32>
    %40 = vector.shape_cast %39 : vector<1xf32> to vector<1x1xf32>
    %cst_18 = arith.constant 3.200000e+01 : f32
    %41 = vector.broadcast %cst_18 : f32 to vector<1x1xf32>
    %42 = arith.divf %40, %41 : vector<1x1xf32>
    %43 = vector.broadcast %35 : vector<1x1xf32> to vector<1x32xf32>
    %44 = arith.subf %31, %43 : vector<1x32xf32>
    %cst_19 = arith.constant 9.99999974E-6 : f32
    %45 = vector.broadcast %cst_19 : f32 to vector<1x1xf32>
    %46 = arith.addf %42, %45 : vector<1x1xf32>
    %47 = math.rsqrt %46 : vector<1x1xf32>
    %48 = vector.broadcast %47 : vector<1x1xf32> to vector<1x32xf32>
    %49 = arith.mulf %44, %48 : vector<1x32xf32>
    %c9 = arith.constant 9 : index
    %c0_20 = arith.constant 0 : index
    %50 = vector.load %arg5[%c9, %c0_20] : memref<112x32xf32, #tpu.memory_space<vmem>>, vector<1x32xf32>
    %51 = arith.mulf %49, %50 : vector<1x32xf32>
    %c10 = arith.constant 10 : index
    %c0_21 = arith.constant 0 : index
    %52 = vector.load %arg5[%c10, %c0_21] : memref<112x32xf32, #tpu.memory_space<vmem>>, vector<1x32xf32>
    %53 = arith.addf %51, %52 : vector<1x32xf32>
    %cst_22 = arith.constant 0.000000e+00 : f32
    %54 = vector.broadcast %cst_22 : f32 to vector<1x32xf32>
    %55 = arith.maximumf %53, %54 : vector<1x32xf32>
    %c80 = arith.constant 80 : index
    %c0_23 = arith.constant 0 : index
    %56 = vector.load %arg5[%c80, %c0_23] : memref<112x32xf32, #tpu.memory_space<vmem>>, vector<32x32xf32>
    %cst_24 = arith.constant dense<0.000000e+00> : vector<1x32xf32>
    %57 = tpu.matmul %28, %56, %cst_24 {dimension_numbers = #tpu.dot_dimension_numbers<[1], [0], [0], [1], [0, 0, 1, 1], [], []>} : vector<1x32xf32>, vector<32x32xf32>, vector<1x32xf32> -> vector<1x32xf32>
    %c11 = arith.constant 11 : index
    %c0_25 = arith.constant 0 : index
    %58 = vector.load %arg5[%c11, %c0_25] : memref<112x32xf32, #tpu.memory_space<vmem>>, vector<1x32xf32>
    %59 = arith.addf %57, %58 : vector<1x32xf32>
    %60 = arith.negf %59 : vector<1x32xf32>
    %61 = math.exp %60 : vector<1x32xf32>
    %cst_26 = arith.constant 1.000000e+00 : f32
    %62 = vector.broadcast %cst_26 : f32 to vector<1x32xf32>
    %63 = arith.addf %62, %61 : vector<1x32xf32>
    %64 = arith.divf %62, %63 : vector<1x32xf32>
    %65 = arith.mulf %4, %64 : vector<1x32xf32>
    %cst_27 = arith.constant dense<0.000000e+00> : vector<32x32xf32>
    %66 = tpu.matmul %65, %28, %cst_27 {dimension_numbers = #tpu.dot_dimension_numbers<[0], [0], [1], [1], [0, 1, 1, 1], [], []>} : vector<1x32xf32>, vector<1x32xf32>, vector<32x32xf32> -> vector<32x32xf32>
    %c0_28 = arith.constant 0 : index
    %67 = memref.load %arg2[%c0_28] : memref<2xf32, #tpu.memory_space<smem>>
    %68 = vector.broadcast %67 : f32 to vector<32x32xf32>
    %69 = arith.mulf %68, %3 : vector<32x32xf32>
    %70 = arith.addf %69, %66 : vector<32x32xf32>
    %c12 = arith.constant 12 : index
    %c0_29 = arith.constant 0 : index
    %71 = vector.load %arg5[%c12, %c0_29] : memref<112x32xf32, #tpu.memory_space<vmem>>, vector<1x32xf32>
    %72 = arith.mulf %55, %71 : vector<1x32xf32>
    %cst_30 = arith.constant dense<0.000000e+00> : vector<1xf32>
    %73 = vector.multi_reduction <add>, %72, %cst_30 [1] : vector<1x32xf32> to vector<1xf32>
    %74 = vector.shape_cast %73 : vector<1xf32> to vector<1x1xf32>
    %c1_31 = arith.constant 1 : index
    %75 = memref.load %arg2[%c1_31] : memref<2xf32, #tpu.memory_space<smem>>
    %76 = vector.broadcast %75 : f32 to vector<1x1xf32>
    %77 = arith.addf %74, %76 : vector<1x1xf32>
    %c0_32 = arith.constant 0 : index
    %c0_33 = arith.constant 0 : index
    %78 = vector.load %arg9[%c0_32, %c0_33] : memref<32x32xf32, #tpu.memory_space<vmem>>, vector<32x32xf32>
    tpu.vector_store %arg9[%c0_32, %c0_33], %70 {strides = array<i32>} : memref<32x32xf32, #tpu.memory_space<vmem>>, vector<32x32xf32>,
    %c0_34 = arith.constant 0 : index
    %c0_35 = arith.constant 0 : index
    %79 = vector.load %arg10[%c0_34, %c0_35] : memref<1x32xf32, #tpu.memory_space<vmem>>, vector<1x32xf32>
    tpu.vector_store %arg10[%c0_34, %c0_35], %55 {strides = array<i32>} : memref<1x32xf32, #tpu.memory_space<vmem>>, vector<1x32xf32>,
    %80 = arith.index_cast %arg0 : i32 to index
    %c0_36 = arith.constant 0 : index
    %81 = vector.load %arg6[%80, %c0_36] : memref<8x32xf32, #tpu.memory_space<vmem>>, vector<1x32xf32>
    tpu.vector_store %arg6[%80, %c0_36], %55 {strides = array<i32>} : memref<8x32xf32, #tpu.memory_space<vmem>>, vector<1x32xf32>,
    %82 = arith.index_cast %arg0 : i32 to index
    %c0_37 = arith.constant 0 : index
    %83 = vector.load %arg7[%82, %c0_37] : memref<8x1xf32, #tpu.memory_space<vmem>>, vector<1x1xf32>
    tpu.vector_store %arg7[%82, %c0_37], %77 {strides = array<i32>} : memref<8x1xf32, #tpu.memory_space<vmem>>, vector<1x1xf32>,
    %c7_i32 = arith.constant 7 : i32
    %84 = arith.cmpi eq, %arg0, %c7_i32 : i32
    %85 = arith.extui %84 : i1 to i32
    %c0_i32_38 = arith.constant 0 : i32
    %86 = arith.cmpi ne, %85, %c0_i32_38 : i32
    scf.if %86 {
      %c0_39 = arith.constant 0 : index
      %c0_40 = arith.constant 0 : index
      %87 = vector.load %arg8[%c0_39, %c0_40] : memref<32x32xf32, #tpu.memory_space<vmem>>, vector<32x32xf32>
      tpu.vector_store %arg8[%c0_39, %c0_40], %70 {strides = array<i32>} : memref<32x32xf32, #tpu.memory_space<vmem>>, vector<32x32xf32>,
    } else {
    }
    return
  }
  func.func @transform_0(%arg0: i32) -> (i32, i32) {
    %c0_i32 = arith.constant 0 : i32
    %c0_i32_0 = arith.constant 0 : i32
    %c0_i32_1 = arith.constant 0 : i32
    return %c0_i32, %c0_i32_0 : i32, i32
  }
  func.func @transform_1(%arg0: i32) -> i32 {
    %c0_i32 = arith.constant 0 : i32
    %c0_i32_0 = arith.constant 0 : i32
    return %c0_i32 : i32
  }
  func.func @transform_2(%arg0: i32) -> (i32, i32) {
    %c0_i32 = arith.constant 0 : i32
    %c0_i32_0 = arith.constant 0 : i32
    %c0_i32_1 = arith.constant 0 : i32
    return %c0_i32, %c0_i32_0 : i32, i32
  }
  func.func @transform_3(%arg0: i32) -> (i32, i32) {
    %c0_i32 = arith.constant 0 : i32
    %c0_i32_0 = arith.constant 0 : i32
    %c0_i32_1 = arith.constant 0 : i32
    return %c0_i32, %c0_i32_0 : i32, i32
  }
  func.func @transform_4(%arg0: i32) -> (i32, i32) {
    %c0_i32 = arith.constant 0 : i32
    %c0_i32_0 = arith.constant 0 : i32
    %c0_i32_1 = arith.constant 0 : i32
    return %c0_i32, %c0_i32_0 : i32, i32
  }
  func.func @transform_5(%arg0: i32) -> (i32, i32) {
    %c0_i32 = arith.constant 0 : i32
    %c0_i32_0 = arith.constant 0 : i32
    %c0_i32_1 = arith.constant 0 : i32
    return %c0_i32, %c0_i32_0 : i32, i32
  }
  func.func @transform_6(%arg0: i32) -> (i32, i32) {
    %c0_i32 = arith.constant 0 : i32
    %c0_i32_0 = arith.constant 0 : i32
    %c0_i32_1 = arith.constant 0 : i32
    return %c0_i32, %c0_i32_0 : i32, i32
  }
  func.func @transform_7(%arg0: i32) -> (i32, i32) {
    %c0_i32 = arith.constant 0 : i32
    %c0_i32_0 = arith.constant 0 : i32
    %c0_i32_1 = arith.constant 0 : i32
    return %c0_i32, %c0_i32_0 : i32, i32
  }
}

</mosaic_0001>

<llo_original>
// kernel: network_forward_seq.1
$region0: #{network_forward_seq.1}
  #allocation0 [shape = 'u32[]', space=smem, size = 0x4, offset = 0x4, fixed_abs, tag = 'smem constant byte address 0x4 - core index']
  #allocation1 [shape = 'u32[144,128]{1,0:T(1,128)}', space=vmem, size = 0x12000, scoped, tag = 'internal scratch']
  #allocation2 [shape = 'f32[32,32]{1,0:T(8,128)}', space=vmem, size = 0x4000, scoped, tag = 'scratch operand']
  #allocation3 [shape = 'f32[1,32]{1,0:T(1,128)}', space=vmem, size = 0x200, scoped, tag = 'scratch operand']
  %s0 = inlined_call_operand.vmem [shape: f32[8,3], index: 0, kind: input, shape index: {}]
  %s1 = inlined_call_operand.vmem [shape: f32[2], index: 1, kind: input, shape index: {}]
  %s2 = inlined_call_operand.vmem [shape: f32[1,32], index: 2, kind: input, shape index: {}]
  %s3 = inlined_call_operand.vmem [shape: f32[32,32], index: 3, kind: input, shape index: {}]
  %s4 = inlined_call_operand.vmem [shape: f32[112,32], index: 4, kind: input, shape index: {}]
  %s5 = inlined_call_operand.hbm [shape: f32[8,32], index: 5, kind: output, shape index: {0}]
  %s6 = inlined_call_operand.vmem [shape: f32[8,1], index: 6, kind: output, shape index: {1}]
  %s7 = inlined_call_operand.hbm [shape: f32[32,32], index: 7, kind: output, shape index: {2}]
  %8 = xla_tuple %s5, %s6, %s7
  %s9 = sld [smem:[#allocation0]]
  $region85: #{network_forward_seq.1} parent=0
    _
  %s11 = ssub.s32 1, %s9
  %s12 = scalar_select 0, %s11, %s9
  $region1: #{network_forward_seq.1} parent=0
    #allocation4 [shape = 'u8[4096]{0}', space=smem, size = 0x1000, scoped, tag = 'input window, operand 0, single buffered']
    #allocation5 [shape = 's32[2]{0}', space=sflag, size = 0x8, scoped, tag = 'scoped memory for network_forward_seq.1']
    #allocation6 [shape = 's32[2]{0}', space=sflag, size = 0x8, scoped, tag = 'scoped memory for network_forward_seq.1']
    #allocation7 [shape = 'u8[512]{0}', space=smem, size = 0x200, scoped, tag = 'input window, operand 1, single buffered']
    #allocation8 [shape = 's32[1]{0}', space=sflag, size = 0x4, scoped, tag = 'scoped memory for network_forward_seq.1']
    #allocation9 [shape = 'u8[4096]{0}', space=vmem, size = 0x1000, scoped, tag = 'output window, operand 0, single buffered']
    #allocation10 [shape = 'u8[16384]{0}', space=vmem, size = 0x4000, scoped, tag = 'output window, operand 2, single buffered']
    #allocation11 [shape = 's32[1]{0}', space=sflag, size = 0x4, scoped, tag = 'scoped memory for network_forward_seq.1']
    %13 = vsyncpa [#allocation6], 0
    %14 = vsyncpa [#allocation8], 0
    %15 = vsyncpa [#allocation5], 0
    %16 = vsyncpa [#allocation11], 0
    loop: start=0, step=1, limit=10
    $region2: #{network_forward_seq.1} parent=1 // loop_pre_header
      _
    $region3: #{network_forward_seq.1} parent=1 // loop_header
      %s18 = sphi 0, %s22
      %p19 = scmp.ge.s32.totalorder %s18, 10
      %s26 = sphi 0, %s26
      %s28 = sphi 0, %s26
      %s29 = sphi 0, %s28
      %s43 = sphi 0, %s29
      %s47 = sphi 0, %s47
      %s49 = sphi 0, %s47
      %s50 = sphi 0, %s49
      %s64 = sphi 0, %s50
      %s68 = sphi 0, %s68
      %s70 = sphi 0, %s68
      %s71 = sphi 0, %s70
      %s85 = sphi 0, %s71
      %s89 = sphi 0, %s89
      %s91 = sphi 0, %s89
      %s92 = sphi 0, %s91
      %s106 = sphi 0, %s92
      %s110 = sphi 0, %s110
      %s112 = sphi 0, %s110
      %s113 = sphi 0, %s112
      %s127 = sphi 0, %s113
      %s131 = sphi 0, %s131
      %s133 = sphi 0, %s131
      %s134 = sphi 0, %s133
      %s148 = sphi 0, %s134
      %s152 = sphi 0, %s152
      %s154 = sphi 0, %s152
      %s155 = sphi 0, %s154
      %s169 = sphi 0, %s155
      %s173 = sphi 0, %s173
      %s175 = sphi 0, %s173
      %s176 = sphi 0, %s175
      %s190 = sphi 0, %s176
    $region4: #{network_forward_seq.1} parent=1 // loop_header_branch
      %21 = sbr.rel (%p19) target = $region8
    $region5: #{network_forward_seq.1} parent=1 // loop_body
      %s23 = ssub.s32 %s18, 1
      %s24 = ssub.s32 %s18, 2
      %s25 = sadd.s32 %s18, 1
      %s27 = sadd.s32 %s26, 1
      %p30 = scmp.eq.s32.totalorder %s18, 7
      %p31 = scmp.ne.s32.totalorder %s26, %s28
      %p32 = scmp.eq.s32.totalorder %s18, 0
      %p33 = por %p31, %p32
      %p34 = scmp.ne.s32.totalorder %s26, %s28
      %p35 = scmp.eq.s32.totalorder %s23, 7
      %p36 = por %p34, %p35
      %p37 = scmp.ne.s32.totalorder %s28, %s29
      %p38 = scmp.eq.s32.totalorder %s23, 0
      %p39 = por %p37, %p38
      %p40 = scmp.ne.s32.totalorder %s28, %s29
      %p41 = scmp.eq.s32.totalorder %s24, 7
      %p42 = por %p40, %p41
      %p44 = scmp.ne.s32.totalorder %s29, %s43
      %p45 = scmp.eq.s32.totalorder %s24, 0
      %p46 = por %p44, %p45
      %s48 = sadd.s32 %s47, 1
      %p51 = scmp.eq.s32.totalorder %s18, 7
      %p52 = scmp.ne.s32.totalorder %s47, %s49
      %p53 = scmp.eq.s32.totalorder %s18, 0
      %p54 = por %p52, %p53
      %p55 = scmp.ne.s32.totalorder %s47, %s49
      %p56 = scmp.eq.s32.totalorder %s23, 7
      %p57 = por %p55, %p56
      %p58 = scmp.ne.s32.totalorder %s49, %s50
      %p59 = scmp.eq.s32.totalorder %s23, 0
      %p60 = por %p58, %p59
      %p61 = scmp.ne.s32.totalorder %s49, %s50
      %p62 = scmp.eq.s32.totalorder %s24, 7
      %p63 = por %p61, %p62
      %p65 = scmp.ne.s32.totalorder %s50, %s64
      %p66 = scmp.eq.s32.totalorder %s24, 0
      %p67 = por %p65, %p66
      %s69 = sadd.s32 %s68, 1
      %p72 = scmp.eq.s32.totalorder %s18, 7
      %p73 = scmp.ne.s32.totalorder %s68, %s70
      %p74 = scmp.eq.s32.totalorder %s18, 0
      %p75 = por %p73, %p74
      %p76 = scmp.ne.s32.totalorder %s68, %s70
      %p77 = scmp.eq.s32.totalorder %s23, 7
      %p78 = por %p76, %p77
      %p79 = scmp.ne.s32.totalorder %s70, %s71
      %p80 = scmp.eq.s32.totalorder %s23, 0
      %p81 = por %p79, %p80
      %p82 = scmp.ne.s32.totalorder %s70, %s71
      %p83 = scmp.eq.s32.totalorder %s24, 7
      %p84 = por %p82, %p83
      %p86 = scmp.ne.s32.totalorder %s71, %s85
      %p87 = scmp.eq.s32.totalorder %s24, 0
      %p88 = por %p86, %p87
      %s90 = sadd.s32 %s89, 1
      %p93 = scmp.eq.s32.totalorder %s18, 7
      %p94 = scmp.ne.s32.totalorder %s89, %s91
      %p95 = scmp.eq.s32.totalorder %s18, 0
      %p96 = por %p94, %p95
      %p97 = scmp.ne.s32.totalorder %s89, %s91
      %p98 = scmp.eq.s32.totalorder %s23, 7
      %p99 = por %p97, %p98
      %p100 = scmp.ne.s32.totalorder %s91, %s92
      %p101 = scmp.eq.s32.totalorder %s23, 0
      %p102 = por %p100, %p101
      %p103 = scmp.ne.s32.totalorder %s91, %s92
      %p104 = scmp.eq.s32.totalorder %s24, 7
      %p105 = por %p103, %p104
      %p107 = scmp.ne.s32.totalorder %s92, %s106
      %p108 = scmp.eq.s32.totalorder %s24, 0
      %p109 = por %p107, %p108
      %s111 = sadd.s32 %s110, 1
      %p114 = scmp.eq.s32.totalorder %s18, 7
      %p115 = scmp.ne.s32.totalorder %s110, %s112
      %p116 = scmp.eq.s32.totalorder %s18, 0
      %p117 = por %p115, %p116
      %p118 = scmp.ne.s32.totalorder %s110, %s112
      %p119 = scmp.eq.s32.totalorder %s23, 7
      %p120 = por %p118, %p119
      %p121 = scmp.ne.s32.totalorder %s112, %s113
      %p122 = scmp.eq.s32.totalorder %s23, 0
      %p123 = por %p121, %p122
      %p124 = scmp.ne.s32.totalorder %s112, %s113
      %p125 = scmp.eq.s32.totalorder %s24, 7
      %p126 = por %p124, %p125
      %p128 = scmp.ne.s32.totalorder %s113, %s127
      %p129 = scmp.eq.s32.totalorder %s24, 0
      %p130 = por %p128, %p129
      %s132 = sadd.s32 %s131, 1
      %p135 = scmp.eq.s32.totalorder %s18, 7
      %p136 = scmp.ne.s32.totalorder %s131, %s133
      %p137 = scmp.eq.s32.totalorder %s18, 0
      %p138 = por %p136, %p137
      %p139 = scmp.ne.s32.totalorder %s131, %s133
      %p140 = scmp.eq.s32.totalorder %s23, 7
      %p141 = por %p139, %p140
      %p142 = scmp.ne.s32.totalorder %s133, %s134
      %p143 = scmp.eq.s32.totalorder %s23, 0
      %p144 = por %p142, %p143
      %p145 = scmp.ne.s32.totalorder %s133, %s134
      %p146 = scmp.eq.s32.totalorder %s24, 7
      %p147 = por %p145, %p146
      %p149 = scmp.ne.s32.totalorder %s134, %s148
      %p150 = scmp.eq.s32.totalorder %s24, 0
      %p151 = por %p149, %p150
      %s153 = sadd.s32 %s152, 1
      %p156 = scmp.eq.s32.totalorder %s18, 7
      %p157 = scmp.ne.s32.totalorder %s152, %s154
      %p158 = scmp.eq.s32.totalorder %s18, 0
      %p159 = por %p157, %p158
      %p160 = scmp.ne.s32.totalorder %s152, %s154
      %p161 = scmp.eq.s32.totalorder %s23, 7
      %p162 = por %p160, %p161
      %p163 = scmp.ne.s32.totalorder %s154, %s155
      %p164 = scmp.eq.s32.totalorder %s23, 0
      %p165 = por %p163, %p164
      %p166 = scmp.ne.s32.totalorder %s154, %s155
      %p167 = scmp.eq.s32.totalorder %s24, 7
      %p168 = por %p166, %p167
      %p170 = scmp.ne.s32.totalorder %s155, %s169
      %p171 = scmp.eq.s32.totalorder %s24, 0
      %p172 = por %p170, %p171
      %s174 = sadd.s32 %s173, 1
      %p177 = scmp.eq.s32.totalorder %s18, 7
      %p178 = scmp.ne.s32.totalorder %s173, %s175
      %p179 = scmp.eq.s32.totalorder %s18, 0
      %p180 = por %p178, %p179
      %p181 = scmp.ne.s32.totalorder %s173, %s175
      %p182 = scmp.eq.s32.totalorder %s23, 7
      %p183 = por %p181, %p182
      %p184 = scmp.ne.s32.totalorder %s175, %s176
      %p185 = scmp.eq.s32.totalorder %s23, 0
      %p186 = por %p184, %p185
      %p187 = scmp.ne.s32.totalorder %s175, %s176
      %p188 = scmp.eq.s32.totalorder %s24, 7
      %p189 = por %p187, %p188
      %p191 = scmp.ne.s32.totalorder %s176, %s190
      %p192 = scmp.eq.s32.totalorder %s24, 0
      %p193 = por %p191, %p192
      %p194 = scmp.le.s32.totalorder 1, %s18
      %p195 = scmp.lt.s32.totalorder %s18, 9
      %p196 = pnand %p194, %p195
      %p197 = pneg %p196
      // Predicated region
      $region9: #{network_forward_seq.1} parent=5 // pred_check
        _
      $region10: #{network_forward_seq.1} parent=5 // pred_check_branch
        %199 = sbr.rel (%p196) target = $region12
      $region11: #{network_forward_seq.1} parent=5 // pred_region
        %s200 = ssub.s32 %s18, 1
        // Predicated region
        $region13: #{network_forward_seq.1} parent=11 // pred_check
          %p201 = pneg %p39
        $region14: #{network_forward_seq.1} parent=11 // pred_check_branch
          %203 = sbr.rel (%p201) target = $region16
        $region15: #{network_forward_seq.1} parent=11 // pred_region
          %s205 = ssub.s32 128, 128
          %206 = vsyncadd [#allocation6], %s205
          %s208 = sshll.u32 %s0, 4
          %s209 = int_to_ptr.vmem [resolvable:$true] %s208
          %211 = dma.vmem_to_smem %s209, 128, [#allocation4], [#allocation6]
        $region16: #{network_forward_seq.1} parent=11 // pred_fallthru
          _
        // Predicated region
        $region17: #{network_forward_seq.1} parent=11 // pred_check
          %p212 = pneg %p60
        $region18: #{network_forward_seq.1} parent=11 // pred_check_branch
          %214 = sbr.rel (%p212) target = $region20
        $region19: #{network_forward_seq.1} parent=11 // pred_region
          %s216 = ssub.s32 16, 16
          %217 = vsyncadd [#allocation8], %s216
          %s219 = sshll.u32 %s1, 4
          %s220 = int_to_ptr.vmem [resolvable:$true] %s219
          %222 = dma.vmem_to_smem %s220, 16, [#allocation7], [#allocation8]
        $region20: #{network_forward_seq.1} parent=11 // pred_fallthru
          _
        // Predicated region
        $region21: #{network_forward_seq.1} parent=11 // pred_check
          %p223 = pneg %p81
        $region22: #{network_forward_seq.1} parent=11 // pred_check_branch
          %225 = sbr.rel (%p223) target = $region24
        $region23: #{network_forward_seq.1} parent=11 // pred_region
          _
        $region24: #{network_forward_seq.1} parent=11 // pred_fallthru
          _
        // Predicated region
        $region25: #{network_forward_seq.1} parent=11 // pred_check
          %p226 = pneg %p102
        $region26: #{network_forward_seq.1} parent=11 // pred_check_branch
          %228 = sbr.rel (%p226) target = $region28
        $region27: #{network_forward_seq.1} parent=11 // pred_region
          _
        $region28: #{network_forward_seq.1} parent=11 // pred_fallthru
          _
        // Predicated region
        $region29: #{network_forward_seq.1} parent=11 // pred_check
          %p229 = pneg %p123
        $region30: #{network_forward_seq.1} parent=11 // pred_check_branch
          %231 = sbr.rel (%p229) target = $region32
        $region31: #{network_forward_seq.1} parent=11 // pred_region
          _
        $region32: #{network_forward_seq.1} parent=11 // pred_fallthru
          _
      $region12: #{network_forward_seq.1} parent=5 // pred_fallthru
        _
      %p232 = scmp.lt.s32.totalorder %s18, 8
      // Predicated region
      $region33: #{network_forward_seq.1} parent=5 // pred_check
        %p233 = pneg %p232
      $region34: #{network_forward_seq.1} parent=5 // pred_check_branch
        %235 = sbr.rel (%p233) target = $region36
      $region35: #{network_forward_seq.1} parent=5 // pred_region
        _
      $region36: #{network_forward_seq.1} parent=5 // pred_fallthru
        _
      %p236 = scmp.le.s32.totalorder 1, %s18
      %p237 = scmp.lt.s32.totalorder %s18, 9
      %p238 = pnand %p236, %p237
      %p239 = pneg %p238
      // Predicated region
      $region37: #{network_forward_seq.1} parent=5 // pred_check
        _
      $region38: #{network_forward_seq.1} parent=5 // pred_check_branch
        %241 = sbr.rel (%p238) target = $region40
      $region39: #{network_forward_seq.1} parent=5 // pred_region
        %s242 = ssub.s32 %s18, 1
        // Predicated region
        $region41: #{network_forward_seq.1} parent=39 // pred_check
          %p243 = pneg %p39
        $region42: #{network_forward_seq.1} parent=39 // pred_check_branch
          %245 = sbr.rel (%p243) target = $region44
        $region43: #{network_forward_seq.1} parent=39 // pred_region
          %246 = dma.done [#allocation6], 128
        $region44: #{network_forward_seq.1} parent=39 // pred_fallthru
          _
        // Predicated region
        $region45: #{network_forward_seq.1} parent=39 // pred_check
          %p247 = pneg %p60
        $region46: #{network_forward_seq.1} parent=39 // pred_check_branch
          %249 = sbr.rel (%p247) target = $region48
        $region47: #{network_forward_seq.1} parent=39 // pred_region
          %250 = dma.done [#allocation8], 16
        $region48: #{network_forward_seq.1} parent=39 // pred_fallthru
          _
        %251 = sfence
        %p252 = pneg %p39
        %p253 = pneg %p36
        %p254 = pneg %p60
        %p255 = pneg %p57
        %p256 = pneg %p81
        %p257 = pneg %p78
        %p258 = pneg %p102
        %p259 = pneg %p99
        %p260 = pneg %p123
        %p261 = pneg %p120
        %p262 = pneg %p144
        %p263 = pneg %p141
        %p264 = pneg %p165
        %p265 = pneg %p162
        %p266 = pneg %p186
        %p267 = pneg %p183
        %p268 = scmp.eq.s32.totalorder %s23, 0
        // Predicated region
        $region49: #{network_forward_seq.1} parent=39 // pred_check
          %p269 = pneg %p268
        $region50: #{network_forward_seq.1} parent=39 // pred_check_branch
          %271 = sbr.rel (%p269) target = $region52
        $region51: #{network_forward_seq.1} parent=39 // pred_region
          %v272 = vld [vmem:[%s3] sm:$0xff]
          %v273 = vld [vmem:[%s3 + $0x8] sm:$0xff]
          %v274 = vld [vmem:[%s3 + $0x10] sm:$0xff]
          %v275 = vld [vmem:[%s3 + $0x18] sm:$0xff]
          %vm276 = vcmask 261120
          %277 = vst.msk [vmem:[#allocation2] sm:$0xff] %vm276, %v272
          %278 = vst.msk [vmem:[#allocation2 + $0x8] sm:$0xff] %vm276, %v273
          %279 = vst.msk [vmem:[#allocation2 + $0x10] sm:$0xff] %vm276, %v274
          %280 = vst.msk [vmem:[#allocation2 + $0x18] sm:$0xff] %vm276, %v275
          %v281 = vld [vmem:[%s2] sm:$0x1]
          %vm282 = vcmask 253952
          %283 = vst.msk [vmem:[#allocation3] sm:$0x1] %vm282, %v281
        $region52: #{network_forward_seq.1} parent=39 // pred_fallthru
          _
        %v284 = vld [vmem:[#allocation2] sm:$0xff]
        %v285 = vld [vmem:[#allocation2 + $0x8] sm:$0xff]
        %v286 = vld [vmem:[#allocation2 + $0x10] sm:$0xff]
        %v287 = vld [vmem:[#allocation2 + $0x18] sm:$0xff]
        %v288 = vld [vmem:[#allocation3] sm:$0x1]
        %s289 = smul.u32 %s23, 128
        %s290 = sld [smem:[#allocation4 + %s289]]
        %s291 = sadd.s32 %s289, 1
        %s292 = sld [smem:[#allocation4 + %s291]]
        %s293 = sadd.s32 %s289, 2
        %s294 = sld [smem:[#allocation4 + %s293]]
        %v295 = vld [vmem:[%s4] sm:$0x1]
        %v296 = vstv %s290
        %v297 = vmul.f32 %v296, %v295
        %v298 = vld [vmem:[%s4 + $0x1] sm:$0x1]
        %v299 = vstv %s292
        %v300 = vmul.f32 %v299, %v298
        %v301 = vadd.f32 %v297, %v300
        %v302 = vld [vmem:[%s4 + $0x2] sm:$0x1]
        %v303 = vstv %s294
        %v304 = vmul.f32 %v303, %v302
        %v305 = vadd.f32 %v301, %v304
        %v306 = vmax.f32 %v305, 0.0
        %v307 = vld [vmem:[%s4 + $0x10] sm:$0xff]
        %v308 = vld [vmem:[%s4 + $0x18] sm:$0xff]
        %v309 = vld [vmem:[%s4 + $0x20] sm:$0xff]
        %v310 = vld [vmem:[%s4 + $0x28] sm:$0xff]
        %v311 = vld [vmem:[%s4 + $0x30] sm:$0xff]
        %v312 = vld [vmem:[%s4 + $0x38] sm:$0xff]
        %v313 = vld [vmem:[%s4 + $0x40] sm:$0xff]
        %v314 = vld [vmem:[%s4 + $0x48] sm:$0xff]
        %v315 = vmul.f32 %v311, %v284
        %v316 = vmul.f32 %v312, %v285
        %v317 = vmul.f32 %v313, %v286
        %v318 = vmul.f32 %v314, %v287
        %v319 = vadd.f32 %v307, %v315
        %v320 = vadd.f32 %v308, %v316
        %v321 = vadd.f32 %v309, %v317
        %v322 = vadd.f32 %v310, %v318
        %vm323 = vcmask 261120
        %v325 = vsel %vm323, %v288, 0
        %327 = vmatprep.subr.mxu0 0.0
        %328 = vmatpush1.msra.mxu0 %v319
        %329 = vmatprep.subr.mxu0 0.0
        %330 = vmatpush1.msra.mxu0 %v320
        %331 = vmatprep.subr.mxu0 0.0
        %332 = vmatpush1.msra.mxu0 %v321
        %333 = vmatprep.subr.mxu0 0.0
        %334 = vmatpush1.msra.mxu0 %v322
        %335 = vmatprep.subr.mxu0 0.0
        %336 = vmatpush1.msra.mxu0 0.0
        %337 = vmatprep.subr.mxu0 0.0
        %338 = vmatpush1.msra.mxu0 0.0
        %339 = vmatprep.subr.mxu0 0.0
        %340 = vmatpush1.msra.mxu0 0.0
        %341 = vmatprep.subr.mxu0 0.0
        %342 = vmatpush1.msra.mxu0 0.0
        %343 = vmatprep.subr.mxu0 0.0
        %344 = vmatpush1.msra.mxu0 0.0
        %345 = vmatprep.subr.mxu0 0.0
        %346 = vmatpush1.msra.mxu0 0.0
        %347 = vmatprep.subr.mxu0 0.0
        %348 = vmatpush1.msra.mxu0 0.0
        %349 = vmatprep.subr.mxu0 0.0
        %350 = vmatpush1.msra.mxu0 0.0
        %351 = vmatprep.subr.mxu0 0.0
        %352 = vmatpush1.msra.mxu0 0.0
        %353 = vmatprep.subr.mxu0 0.0
        %354 = vmatpush1.msra.mxu0 0.0
        %355 = vmatprep.subr.mxu0 0.0
        %356 = vmatpush1.msra.mxu0 0.0
        %357 = vmatprep.subr.mxu0 0.0
        %358 = vmatpush1.msra.mxu0 0.0
        %359 = vmatprep.subr.mxu0 0.0
        %360 = vmatpush1.msra.mxu0 0.0
        %361 = vmatprep.subr.mxu0 0.0
        %362 = vmatpush1.msra.mxu0 0.0
        %363 = vmatprep.subr.mxu0 0.0
        %364 = vmatpush1.msra.mxu0 0.0
        %365 = vmatprep.subr.mxu0 0.0
        %366 = vmatpush1.msra.mxu0 0.0
        %367 = vmatprep.subr.mxu0 0.0
        %368 = vmatpush1.msra.mxu0 0.0
        %369 = vmatprep.subr.mxu0 0.0
        %370 = vmatpush1.msra.mxu0 0.0
        %371 = vmatprep.subr.mxu0 0.0
        %372 = vmatpush1.msra.mxu0 0.0
        %373 = vmatprep.subr.mxu0 0.0
        %374 = vmatpush1.msra.mxu0 0.0
        %375 = vmatprep.subr.mxu0 0.0
        %376 = vmatpush1.msra.mxu0 0.0
        %377 = vmatprep.subr.mxu0 0.0
        %378 = vmatpush1.msra.mxu0 0.0
        %379 = vmatprep.subr.mxu0 0.0
        %380 = vmatpush1.msra.mxu0 0.0
        %381 = vmatprep.subr.mxu0 0.0
        %382 = vmatpush1.msra.mxu0 0.0
        %383 = vmatprep.subr.mxu0 0.0
        %384 = vmatpush1.msra.mxu0 0.0
        %385 = vmatprep.subr.mxu0 0.0
        %386 = vmatpush1.msra.mxu0 0.0
        %387 = vmatprep.subr.mxu0 0.0
        %388 = vmatpush1.msra.mxu0 0.0
        %389 = vmatprep.subr.mxu0 0.0
        %390 = vmatpush1.msra.mxu0 0.0
        %391 = vmatprep.mubr.f32.mxu0 0.0
        %392 = vmatmul.mubr.f32.gmra.mrb[0].mxu0 %v325
        %v393 = vpop.f32.mrb[0].mxu0
        %v394 = vadd.f32 0.0, %v393
        %v395 = vpop.f32.mrb[0].mxu0
        %396 = vdwg.mxu0
        %v397 = vadd.f32 %v394, %v306
        %v398 = vld [vmem:[%s4 + $0x8] sm:$0x1]
        %v399 = vadd.f32 %v397, %v398
        %vm400 = vcmask 253952
        %v401 = vsel %vm400, %v399, 0.0
        %402 = vadd.xlane.f32.xlu0 %v401
        %v403 = vpop.xlane.xlu0 %402
        %v404 = vrcp.pop 32.0
        %v405 = vmul.f32 %v403, %v404
        %v406 = vsub.f32 %v399, %v405
        %v407 = vmul.f32 %v406, %v406
        %v408 = vsel %vm400, %v407, 0.0
        %409 = vadd.xlane.f32.xlu0 %v408
        %v410 = vpop.xlane.xlu0 %409
        %v411 = vmul.f32 %v410, %v404
        %v412 = vadd.f32 %v411, 1e-05
        %v413 = vrsqrt.pop %v412
        %v414 = vmul.f32 %v406, %v413
        %v415 = vld [vmem:[%s4 + $0x9] sm:$0x1]
        %v416 = vmul.f32 %v414, %v415
        %v417 = vld [vmem:[%s4 + $0xa] sm:$0x1]
        %v418 = vadd.f32 %v416, %v417
        %v419 = vmax.f32 %v418, 0.0
        %v420 = vld [vmem:[%s4 + $0x50] sm:$0xff]
        %v421 = vld [vmem:[%s4 + $0x58] sm:$0xff]
        %v422 = vld [vmem:[%s4 + $0x60] sm:$0xff]
        %v423 = vld [vmem:[%s4 + $0x68] sm:$0xff]
        %v424 = vld [vmem:[%s4 + $0xb] sm:$0x1]
        %v426 = vsel %vm323, %v394, 0
        %428 = vmatprep.subr.mxu0 0.0
        %429 = vmatpush1.msra.mxu0 %v420
        %430 = vmatprep.subr.mxu0 0.0
        %431 = vmatpush1.msra.mxu0 %v421
        %432 = vmatprep.subr.mxu0 0.0
        %433 = vmatpush1.msra.mxu0 %v422
        %434 = vmatprep.subr.mxu0 0.0
        %435 = vmatpush1.msra.mxu0 %v423
        %436 = vmatprep.subr.mxu0 0.0
        %437 = vmatpush1.msra.mxu0 0.0
        %438 = vmatprep.subr.mxu0 0.0
        %439 = vmatpush1.msra.mxu0 0.0
        %440 = vmatprep.subr.mxu0 0.0
        %441 = vmatpush1.msra.mxu0 0.0
        %442 = vmatprep.subr.mxu0 0.0
        %443 = vmatpush1.msra.mxu0 0.0
        %444 = vmatprep.subr.mxu0 0.0
        %445 = vmatpush1.msra.mxu0 0.0
        %446 = vmatprep.subr.mxu0 0.0
        %447 = vmatpush1.msra.mxu0 0.0
        %448 = vmatprep.subr.mxu0 0.0
        %449 = vmatpush1.msra.mxu0 0.0
        %450 = vmatprep.subr.mxu0 0.0
        %451 = vmatpush1.msra.mxu0 0.0
        %452 = vmatprep.subr.mxu0 0.0
        %453 = vmatpush1.msra.mxu0 0.0
        %454 = vmatprep.subr.mxu0 0.0
        %455 = vmatpush1.msra.mxu0 0.0
        %456 = vmatprep.subr.mxu0 0.0
        %457 = vmatpush1.msra.mxu0 0.0
        %458 = vmatprep.subr.mxu0 0.0
        %459 = vmatpush1.msra.mxu0 0.0
        %460 = vmatprep.subr.mxu0 0.0
        %461 = vmatpush1.msra.mxu0 0.0
        %462 = vmatprep.subr.mxu0 0.0
        %463 = vmatpush1.msra.mxu0 0.0
        %464 = vmatprep.subr.mxu0 0.0
        %465 = vmatpush1.msra.mxu0 0.0
        %466 = vmatprep.subr.mxu0 0.0
        %467 = vmatpush1.msra.mxu0 0.0
        %468 = vmatprep.subr.mxu0 0.0
        %469 = vmatpush1.msra.mxu0 0.0
        %470 = vmatprep.subr.mxu0 0.0
        %471 = vmatpush1.msra.mxu0 0.0
        %472 = vmatprep.subr.mxu0 0.0
        %473 = vmatpush1.msra.mxu0 0.0
        %474 = vmatprep.subr.mxu0 0.0
        %475 = vmatpush1.msra.mxu0 0.0
        %476 = vmatprep.subr.mxu0 0.0
        %477 = vmatpush1.msra.mxu0 0.0
        %478 = vmatprep.subr.mxu0 0.0
        %479 = vmatpush1.msra.mxu0 0.0
        %480 = vmatprep.subr.mxu0 0.0
        %481 = vmatpush1.msra.mxu0 0.0
        %482 = vmatprep.subr.mxu0 0.0
        %483 = vmatpush1.msra.mxu0 0.0
        %484 = vmatprep.subr.mxu0 0.0
        %485 = vmatpush1.msra.mxu0 0.0
        %486 = vmatprep.subr.mxu0 0.0
        %487 = vmatpush1.msra.mxu0 0.0
        %488 = vmatprep.subr.mxu0 0.0
        %489 = vmatpush1.msra.mxu0 0.0
        %490 = vmatprep.subr.mxu0 0.0
        %491 = vmatpush1.msra.mxu0 0.0
        %492 = vmatprep.mubr.f32.mxu0 0.0
        %493 = vmatmul.mubr.f32.gmra.mrb[0].mxu0 %v426
        %v494 = vpop.f32.mrb[0].mxu0
        %v495 = vadd.f32 %v424, %v494
        %v496 = vpop.f32.mrb[0].mxu0
        %497 = vdwg.mxu0
        %v498 = vxor.u32 %v495, 2147483648
        %v499 = vmul.f32 %v498, 1.442695
        %v500 = vpow.pop %v499
        %v501 = vadd.f32 %v500, 1.0
        %v502 = vrcp.pop %v501
        %v503 = vmul.f32 1.0, %v502
        %v504 = vmul.f32 %v288, %v503
        %505 = vxpose.xlu0.b32.start [1/16] %v504, 128
        %506 = vxpose.xlu0.b32.cont [2/16] 0.0, 128
        %507 = vxpose.xlu0.b32.cont [3/16] 0.0, 128
        %508 = vxpose.xlu0.b32.cont [4/16] 0.0, 128
        %509 = vxpose.xlu0.b32.cont [5/16] 0.0, 128
        %510 = vxpose.xlu0.b32.cont [6/16] 0.0, 128
        %511 = vxpose.xlu0.b32.cont [7/16] 0.0, 128
        %512 = vxpose.xlu0.b32.cont [8/16] 0.0, 128
        %513 = vxpose.xlu0.b32.cont [9/16] 0.0, 128
        %514 = vxpose.xlu0.b32.cont [10/16] 0.0, 128
        %515 = vxpose.xlu0.b32.cont [11/16] 0.0, 128
        %516 = vxpose.xlu0.b32.cont [12/16] 0.0, 128
        %517 = vxpose.xlu0.b32.cont [13/16] 0.0, 128
        %518 = vxpose.xlu0.b32.cont [14/16] 0.0, 128
        %519 = vxpose.xlu0.b32.cont [15/16] 0.0, 128
        %520 = vxpose.xlu0.b32.end [16/16] 0.0, 128
        %v521 = vpop.trf.xlu0
        %v522 = vpop.trf.xlu0
        %v523 = vpop.trf.xlu0
        %v524 = vpop.trf.xlu0
        %v525 = vpop.trf.xlu0
        %v526 = vpop.trf.xlu0
        %v527 = vpop.trf.xlu0
        %v528 = vpop.trf.xlu0
        %v529 = vpop.trf.xlu0
        %v530 = vpop.trf.xlu0
        %v531 = vpop.trf.xlu0
        %v532 = vpop.trf.xlu0
        %v533 = vpop.trf.xlu0
        %v534 = vpop.trf.xlu0
        %v535 = vpop.trf.xlu0
        %v536 = vpop.trf.xlu0
        %vm537 = vcmask 7168
        %v539 = vsel %vm537, %v521, 0
        %v542 = vsel %vm537, %v522, 0
        %v545 = vsel %vm537, %v523, 0
        %v548 = vsel %vm537, %v524, 0
        %vm550 = vcmask 1040384
        %v551 = vsel %vm550, %v394, 0
        %553 = vmatprep.subr.mxu0 0.0
        %554 = vmatpush1.msra.mxu0 %v551
        %555 = vmatprep.subr.mxu0 0.0
        %556 = vmatpush1.msra.mxu0 0.0
        %557 = vmatprep.subr.mxu0 0.0
        %558 = vmatpush1.msra.mxu0 0.0
        %559 = vmatprep.subr.mxu0 0.0
        %560 = vmatpush1.msra.mxu0 0.0
        %561 = vmatprep.subr.mxu0 0.0
        %562 = vmatpush1.msra.mxu0 0.0
        %563 = vmatprep.subr.mxu0 0.0
        %564 = vmatpush1.msra.mxu0 0.0
        %565 = vmatprep.subr.mxu0 0.0
        %566 = vmatpush1.msra.mxu0 0.0
        %567 = vmatprep.subr.mxu0 0.0
        %568 = vmatpush1.msra.mxu0 0.0
        %569 = vmatprep.subr.mxu0 0.0
        %570 = vmatpush1.msra.mxu0 0.0
        %571 = vmatprep.subr.mxu0 0.0
        %572 = vmatpush1.msra.mxu0 0.0
        %573 = vmatprep.subr.mxu0 0.0
        %574 = vmatpush1.msra.mxu0 0.0
        %575 = vmatprep.subr.mxu0 0.0
        %576 = vmatpush1.msra.mxu0 0.0
        %577 = vmatprep.subr.mxu0 0.0
        %578 = vmatpush1.msra.mxu0 0.0
        %579 = vmatprep.subr.mxu0 0.0
        %580 = vmatpush1.msra.mxu0 0.0
        %581 = vmatprep.subr.mxu0 0.0
        %582 = vmatpush1.msra.mxu0 0.0
        %583 = vmatprep.subr.mxu0 0.0
        %584 = vmatpush1.msra.mxu0 0.0
        %585 = vmatprep.subr.mxu0 0.0
        %586 = vmatpush1.msra.mxu0 0.0
        %587 = vmatprep.subr.mxu0 0.0
        %588 = vmatpush1.msra.mxu0 0.0
        %589 = vmatprep.subr.mxu0 0.0
        %590 = vmatpush1.msra.mxu0 0.0
        %591 = vmatprep.subr.mxu0 0.0
        %592 = vmatpush1.msra.mxu0 0.0
        %593 = vmatprep.subr.mxu0 0.0
        %594 = vmatpush1.msra.mxu0 0.0
        %595 = vmatprep.subr.mxu0 0.0
        %596 = vmatpush1.msra.mxu0 0.0
        %597 = vmatprep.subr.mxu0 0.0
        %598 = vmatpush1.msra.mxu0 0.0
        %599 = vmatprep.subr.mxu0 0.0
        %600 = vmatpush1.msra.mxu0 0.0
        %601 = vmatprep.subr.mxu0 0.0
        %602 = vmatpush1.msra.mxu0 0.0
        %603 = vmatprep.subr.mxu0 0.0
        %604 = vmatpush1.msra.mxu0 0.0
        %605 = vmatprep.subr.mxu0 0.0
        %606 = vmatpush1.msra.mxu0 0.0
        %607 = vmatprep.subr.mxu0 0.0
        %608 = vmatpush1.msra.mxu0 0.0
        %609 = vmatprep.subr.mxu0 0.0
        %610 = vmatpush1.msra.mxu0 0.0
        %611 = vmatprep.subr.mxu0 0.0
        %612 = vmatpush1.msra.mxu0 0.0
        %613 = vmatprep.subr.mxu0 0.0
        %614 = vmatpush1.msra.mxu0 0.0
        %615 = vmatprep.subr.mxu0 0.0
        %616 = vmatpush1.msra.mxu0 0.0
        %617 = vmatprep.mubr.f32.mxu0 0.0
        %618 = vmatmul.mubr.f32.gmra.mrb[0].mxu0 %v539
        %v619 = vpop.f32.mrb[0].mxu0
        %v620 = vadd.f32 0.0, %v619
        %v621 = vpop.f32.mrb[0].mxu0
        %622 = vmatprep.mubr.f32.mxu0 0.0
        %623 = vmatmul.mubr.f32.gmra.mrb[0].mxu0 %v542
        %v624 = vpop.f32.mrb[0].mxu0
        %v625 = vadd.f32 0.0, %v624
        %v626 = vpop.f32.mrb[0].mxu0
        %627 = vmatprep.mubr.f32.mxu0 0.0
        %628 = vmatmul.mubr.f32.gmra.mrb[0].mxu0 %v545
        %v629 = vpop.f32.mrb[0].mxu0
        %v630 = vadd.f32 0.0, %v629
        %v631 = vpop.f32.mrb[0].mxu0
        %632 = vmatprep.mubr.f32.mxu0 0.0
        %633 = vmatmul.mubr.f32.gmra.mrb[0].mxu0 %v548
        %v634 = vpop.f32.mrb[0].mxu0
        %v635 = vadd.f32 0.0, %v634
        %v636 = vpop.f32.mrb[0].mxu0
        %637 = vdwg.mxu0
        %s638 = sld [smem:[#allocation7]]
        %v639 = vstv %s638
        %v640 = vmul.f32 %v639, %v284
        %v641 = vmul.f32 %v639, %v285
        %v642 = vmul.f32 %v639, %v286
        %v643 = vmul.f32 %v639, %v287
        %v644 = vadd.f32 %v640, %v620
        %v645 = vadd.f32 %v641, %v625
        %v646 = vadd.f32 %v642, %v630
        %v647 = vadd.f32 %v643, %v635
        %v648 = vld [vmem:[%s4 + $0xc] sm:$0x1]
        %v649 = vmul.f32 %v419, %v648
        %v650 = vsel %vm400, %v649, 0.0
        %651 = vadd.xlane.f32.xlu0 %v650
        %v652 = vpop.xlane.xlu0 %651
        %s653 = sld [smem:[#allocation7 + $0x1]]
        %v654 = vstv %s653
        %v655 = vadd.f32 %v652, %v654
        %656 = vst.msk [vmem:[#allocation2] sm:$0xff] %vm323, %v644
        %657 = vst.msk [vmem:[#allocation2 + $0x8] sm:$0xff] %vm323, %v645
        %658 = vst.msk [vmem:[#allocation2 + $0x10] sm:$0xff] %vm323, %v646
        %659 = vst.msk [vmem:[#allocation2 + $0x18] sm:$0xff] %vm323, %v647
        %660 = vst.msk [vmem:[#allocation3] sm:$0x1] %vm400, %v419
        %s661 = scalar_lea.vmem [#allocation9], %s23
        %662 = vst.msk [vmem:[%s661] sm:$0x1] %vm400, %v419
        %s663 = scalar_lea.vmem %s6, %s23
        %vm664 = vcmask 0
        %665 = vst.msk [vmem:[%s663] sm:$0x1] %vm664, %v655
        %p666 = scmp.eq.s32.totalorder %s23, 7
        // Predicated region
        $region53: #{network_forward_seq.1} parent=39 // pred_check
          %p667 = pneg %p666
        $region54: #{network_forward_seq.1} parent=39 // pred_check_branch
          %669 = sbr.rel (%p667) target = $region56
        $region55: #{network_forward_seq.1} parent=39 // pred_region
          %670 = vst.msk [vmem:[#allocation10] sm:$0xff] %vm323, %v644
          %671 = vst.msk [vmem:[#allocation10 + $0x8] sm:$0xff] %vm323, %v645
          %672 = vst.msk [vmem:[#allocation10 + $0x10] sm:$0xff] %vm323, %v646
          %673 = vst.msk [vmem:[#allocation10 + $0x18] sm:$0xff] %vm323, %v647
        $region56: #{network_forward_seq.1} parent=39 // pred_fallthru
          _
        // Predicated region
        $region57: #{network_forward_seq.1} parent=39 // pred_check
          %p674 = pneg %p141
        $region58: #{network_forward_seq.1} parent=39 // pred_check_branch
          %676 = sbr.rel (%p674) target = $region60
        $region59: #{network_forward_seq.1} parent=39 // pred_region
          %s678 = ssub.s32 128, 128
          %679 = vsyncadd [#allocation5], %s678
          %s681 = sshll.u32 [#allocation9], 4
          %s682 = int_to_ptr.vmem [resolvable:$true] %s681
          %684 = dma.vmem_to_hbm [thread:$0]  %s682, 128, %s5, [#allocation5]
        $region60: #{network_forward_seq.1} parent=39 // pred_fallthru
          _
        // Predicated region
        $region61: #{network_forward_seq.1} parent=39 // pred_check
          %p685 = pneg %p162
        $region62: #{network_forward_seq.1} parent=39 // pred_check_branch
          %687 = sbr.rel (%p685) target = $region64
        $region63: #{network_forward_seq.1} parent=39 // pred_region
          _
        $region64: #{network_forward_seq.1} parent=39 // pred_fallthru
          _
        // Predicated region
        $region65: #{network_forward_seq.1} parent=39 // pred_check
          %p688 = pneg %p183
        $region66: #{network_forward_seq.1} parent=39 // pred_check_branch
          %690 = sbr.rel (%p688) target = $region68
        $region67: #{network_forward_seq.1} parent=39 // pred_region
          %s692 = ssub.s32 512, 512
          %693 = vsyncadd [#allocation11], %s692
          %s694 = sshll.u32 [#allocation10], 4
          %s695 = int_to_ptr.vmem [resolvable:$true] %s694
          %700 = dma.vmem_to_hbm [thread:$0]  %s695, 512, %s7, [#allocation11], 128, 128, 8
        $region68: #{network_forward_seq.1} parent=39 // pred_fallthru
          _
        // Predicated region
        $region69: #{network_forward_seq.1} parent=39 // pred_check
          %p701 = pneg %p141
        $region70: #{network_forward_seq.1} parent=39 // pred_check_branch
          %703 = sbr.rel (%p701) target = $region72
        $region71: #{network_forward_seq.1} parent=39 // pred_region
          %704 = dma.done [#allocation5], 128
        $region72: #{network_forward_seq.1} parent=39 // pred_fallthru
          _
        // Predicated region
        $region73: #{network_forward_seq.1} parent=39 // pred_check
          %p705 = pneg %p162
        $region74: #{network_forward_seq.1} parent=39 // pred_check_branch
          %707 = sbr.rel (%p705) target = $region76
        $region75: #{network_forward_seq.1} parent=39 // pred_region
          _
        $region76: #{network_forward_seq.1} parent=39 // pred_fallthru
          _
        // Predicated region
        $region77: #{network_forward_seq.1} parent=39 // pred_check
          %p708 = pneg %p183
        $region78: #{network_forward_seq.1} parent=39 // pred_check_branch
          %710 = sbr.rel (%p708) target = $region80
        $region79: #{network_forward_seq.1} parent=39 // pred_region
          %711 = dma.done [#allocation11], 512
        $region80: #{network_forward_seq.1} parent=39 // pred_fallthru
          _
      $region40: #{network_forward_seq.1} parent=5 // pred_fallthru
        _
      %p712 = scmp.le.s32.totalorder 2, %s18
      // Predicated region
      $region81: #{network_forward_seq.1} parent=5 // pred_check
        %p713 = pneg %p712
      $region82: #{network_forward_seq.1} parent=5 // pred_check_branch
        %715 = sbr.rel (%p713) target = $region84
      $region83: #{network_forward_seq.1} parent=5 // pred_region
        %s716 = ssub.s32 %s18, 2
      $region84: #{network_forward_seq.1} parent=5 // pred_fallthru
        _
    $region6: #{network_forward_seq.1} parent=1 // loop_footer
      %s22 = sadd.s32 1, %s18
    $region7: #{network_forward_seq.1} parent=1 // loop_footer_branch
      %17 = sbr.rel target = $region3
    $region8: #{network_forward_seq.1} parent=1 // loop_exit
      _
    %717 = vsyncpa [#allocation5], 1
    %s718 = scalar_lea.sflag [#allocation5], 1
    %719 = vsyncpa %s718, 1
    %720 = vsyncpa [#allocation11], 1
    %721 = vsyncpa [#allocation6], 1
    %s722 = scalar_lea.sflag [#allocation6], 1
    %723 = vsyncpa %s722, 1
    %724 = vsyncpa [#allocation8], 1

</llo_original>
